<compile_context>
chip_gen: v7x
topology: tpu7x:2x2x1
jax: 0.10.0
libtpu: 0.0.40
codegen_flags: <defaults>
</compile_context>

<pallas_src>
import functools

import jax
import jax.numpy as jnp
from jax.experimental import pallas as pl
from jax.experimental.pallas import tpu as pltpu


def _gather_rows_kernel(ids_ref, *refs, rows_per_step):
    # ids_ref:    SMEM (N_pad,) int32  -- consumed by the index_maps only.
    # refs[:-1]:  rows_per_step VMEM blocks, each (1, 1, V_pad): the gathered
    #             probability-table rows for this output tile (DMA'd by Pallas
    #             using the data-dependent index_maps).
    # refs[-1]:   VMEM (rows_per_step, 1, V_pad): lane-dense output tile.
    del ids_ref  # indices were already used by the BlockSpec index_maps
    out_ref = refs[-1]
    for g in range(rows_per_step):
        # Pure copy: row g of this tile <- gathered table row g.
        out_ref[pl.ds(g, 1)] = refs[g][...]


def dummy_lm_forward(probs, decoder_input_ids, *, rows_per_step=8):
    """JAX/Pallas equivalent of DummyLM.forward(_, decoder_input_ids)."""
    B, T = decoder_input_ids.shape
    VOCAB, V = probs.shape
    out_dtype = probs.dtype

    if T <= 1:
        # ret = out[:, 1:] is empty; never hand Pallas a zero-extent block.
        return (jnp.zeros((B, 0, V), dtype=out_dtype),)

    # Keep the output lane-dense: pad V up to a multiple of 128 (sliced off at
    # the end). V=128 in the demo, so this is a no-op there.
    v_pad = ((V + 127) // 128) * 128
    probs_p = probs if v_pad == V else jnp.pad(probs, ((0, 0), (0, v_pad - V)))
    # View each table row as its own (1, V_pad) block so every BlockSpec obeys
    # the (sublane, lane) tiling rules exactly.
    probs_3d = probs_p.reshape(VOCAB, 1, v_pad)

    g = rows_per_step
    n = B * (T - 1)
    n_pad = ((n + g - 1) // g) * g            # whole tiles of gathered rows
    n_tiles = n_pad // g

    ids = decoder_input_ids[:, 1:].reshape(n).astype(jnp.int32)
    ids = jnp.pad(ids, (0, n_pad - n))        # tail rows gather row 0; sliced off

    def make_in_spec(gg):
        # Data-dependent row gather: the block row index for input slot `gg`
        # of grid step `i` comes straight from the prefetched SMEM ids.
        def index_map(i, ids_ref):
            return (ids_ref[i * g + gg], 0, 0)
        return pl.BlockSpec((1, 1, v_pad), index_map)

    grid_spec = pltpu.PrefetchScalarGridSpec(
        num_scalar_prefetch=1,                # ids -> SMEM, feeds the index_maps
        grid=(n_tiles,),
        in_specs=[make_in_spec(gg) for gg in range(g)],
        out_specs=pl.BlockSpec((g, 1, v_pad), lambda i, ids_ref: (i, 0, 0)),
    )

    kernel = functools.partial(_gather_rows_kernel, rows_per_step=g)

    out_flat = pl.pallas_call(
        kernel,
        out_shape=jax.ShapeDtypeStruct((n_pad, 1, v_pad), out_dtype),
        grid_spec=grid_spec,
        compiler_params=pltpu.CompilerParams(
            # Independent output tiles -> shard across both v7x TensorCores.
            dimension_semantics=("parallel",),
        ),
    )(ids, *([probs_3d] * g))

    ret = out_flat[:n, 0, :V].reshape(B, T - 1, V)
    return (ret,)


if __name__ == "__main__":
    key = jax.random.PRNGKey(0)
    k_probs, k_ids = jax.random.split(key)

    VOCAB, V = 32, 128   # vocabulary rows, per-token "probability" vector width
    B, T = 2, 8          # batch, decoder sequence length

    # Deterministic synthetic parameters (the registered buffer `probs`).
    probs = jax.nn.softmax(
        jax.random.normal(k_probs, (VOCAB, V), dtype=jnp.float32), axis=-1
    )
    decoder_input_ids = jax.random.randint(
        k_ids, (B, T), minval=0, maxval=VOCAB, dtype=jnp.int32
    )

    (ret,) = dummy_lm_forward(probs, decoder_input_ids)
    ret = jax.block_until_ready(ret)

    # Reference: plain JAX reproduction of the torch forward.
    ref = probs[decoder_input_ids][:, 1:]
    assert ret.shape == (B, T - 1, V), ret.shape
    # DMA gather is an exact copy -> demand bit-identical results.
    assert jnp.array_equal(ret, ref), "mismatch vs reference gather"

    print("KERNEL_OK")
</pallas_src>

<mosaic_0001>
module attributes {stable_mosaic.version = 11 : i64} {
  func.func @_gather_rows_kernel(%arg0: i32, %arg1: memref<16xi32, #tpu.memory_space<smem>>, %arg2: memref<1x1x128xf32, #tpu.memory_space<vmem>>, %arg3: memref<1x1x128xf32, #tpu.memory_space<vmem>>, %arg4: memref<1x1x128xf32, #tpu.memory_space<vmem>>, %arg5: memref<1x1x128xf32, #tpu.memory_space<vmem>>, %arg6: memref<1x1x128xf32, #tpu.memory_space<vmem>>, %arg7: memref<1x1x128xf32, #tpu.memory_space<vmem>>, %arg8: memref<1x1x128xf32, #tpu.memory_space<vmem>>, %arg9: memref<1x1x128xf32, #tpu.memory_space<vmem>>, %arg10: memref<8x1x128xf32, #tpu.memory_space<vmem>>) attributes {dimension_semantics = [#tpu.dimension_semantics<parallel>], iteration_bounds = array<i64: 2>, scalar_prefetch = 1 : i64, scratch_operands = 0 : i64, tpu.core_type = #tpu.core_type<tc>, window_params = [{transform_indices = @transform_0, window_bounds = array<i64: 1, 1, 128>}, {transform_indices = @transform_1, window_bounds = array<i64: 1, 1, 128>}, {transform_indices = @transform_2, window_bounds = array<i64: 1, 1, 128>}, {transform_indices = @transform_3, window_bounds = array<i64: 1, 1, 128>}, {transform_indices = @transform_4, window_bounds = array<i64: 1, 1, 128>}, {transform_indices = @transform_5, window_bounds = array<i64: 1, 1, 128>}, {transform_indices = @transform_6, window_bounds = array<i64: 1, 1, 128>}, {transform_indices = @transform_7, window_bounds = array<i64: 1, 1, 128>}, {transform_indices = @transform_8, window_bounds = array<i64: 8, 1, 128>}]} {
    %c0 = arith.constant 0 : index
    %c0_0 = arith.constant 0 : index
    %c0_1 = arith.constant 0 : index
    %0 = vector.load %arg2[%c0, %c0_0, %c0_1] : memref<1x1x128xf32, #tpu.memory_space<vmem>>, vector<1x1x128xf32>
    %c0_2 = arith.constant 0 : index
    %c0_3 = arith.constant 0 : index
    %c0_4 = arith.constant 0 : index
    %1 = vector.load %arg10[%c0_2, %c0_3, %c0_4] : memref<8x1x128xf32, #tpu.memory_space<vmem>>, vector<1x1x128xf32>
    tpu.vector_store %arg10[%c0_2, %c0_3, %c0_4], %0 {strides = array<i32>} : memref<8x1x128xf32, #tpu.memory_space<vmem>>, vector<1x1x128xf32>,
    %c0_5 = arith.constant 0 : index
    %c0_6 = arith.constant 0 : index
    %c0_7 = arith.constant 0 : index
    %2 = vector.load %arg3[%c0_5, %c0_6, %c0_7] : memref<1x1x128xf32, #tpu.memory_space<vmem>>, vector<1x1x128xf32>
    %c1 = arith.constant 1 : index
    %c0_8 = arith.constant 0 : index
    %c0_9 = arith.constant 0 : index
    %3 = vector.load %arg10[%c1, %c0_8, %c0_9] : memref<8x1x128xf32, #tpu.memory_space<vmem>>, vector<1x1x128xf32>
    tpu.vector_store %arg10[%c1, %c0_8, %c0_9], %2 {strides = array<i32>} : memref<8x1x128xf32, #tpu.memory_space<vmem>>, vector<1x1x128xf32>,
    %c0_10 = arith.constant 0 : index
    %c0_11 = arith.constant 0 : index
    %c0_12 = arith.constant 0 : index
    %4 = vector.load %arg4[%c0_10, %c0_11, %c0_12] : memref<1x1x128xf32, #tpu.memory_space<vmem>>, vector<1x1x128xf32>
    %c2 = arith.constant 2 : index
    %c0_13 = arith.constant 0 : index
    %c0_14 = arith.constant 0 : index
    %5 = vector.load %arg10[%c2, %c0_13, %c0_14] : memref<8x1x128xf32, #tpu.memory_space<vmem>>, vector<1x1x128xf32>
    tpu.vector_store %arg10[%c2, %c0_13, %c0_14], %4 {strides = array<i32>} : memref<8x1x128xf32, #tpu.memory_space<vmem>>, vector<1x1x128xf32>,
    %c0_15 = arith.constant 0 : index
    %c0_16 = arith.constant 0 : index
    %c0_17 = arith.constant 0 : index
    %6 = vector.load %arg5[%c0_15, %c0_16, %c0_17] : memref<1x1x128xf32, #tpu.memory_space<vmem>>, vector<1x1x128xf32>
    %c3 = arith.constant 3 : index
    %c0_18 = arith.constant 0 : index
    %c0_19 = arith.constant 0 : index
    %7 = vector.load %arg10[%c3, %c0_18, %c0_19] : memref<8x1x128xf32, #tpu.memory_space<vmem>>, vector<1x1x128xf32>
    tpu.vector_store %arg10[%c3, %c0_18, %c0_19], %6 {strides = array<i32>} : memref<8x1x128xf32, #tpu.memory_space<vmem>>, vector<1x1x128xf32>,
    %c0_20 = arith.constant 0 : index
    %c0_21 = arith.constant 0 : index
    %c0_22 = arith.constant 0 : index
    %8 = vector.load %arg6[%c0_20, %c0_21, %c0_22] : memref<1x1x128xf32, #tpu.memory_space<vmem>>, vector<1x1x128xf32>
    %c4 = arith.constant 4 : index
    %c0_23 = arith.constant 0 : index
    %c0_24 = arith.constant 0 : index
    %9 = vector.load %arg10[%c4, %c0_23, %c0_24] : memref<8x1x128xf32, #tpu.memory_space<vmem>>, vector<1x1x128xf32>
    tpu.vector_store %arg10[%c4, %c0_23, %c0_24], %8 {strides = array<i32>} : memref<8x1x128xf32, #tpu.memory_space<vmem>>, vector<1x1x128xf32>,
    %c0_25 = arith.constant 0 : index
    %c0_26 = arith.constant 0 : index
    %c0_27 = arith.constant 0 : index
    %10 = vector.load %arg7[%c0_25, %c0_26, %c0_27] : memref<1x1x128xf32, #tpu.memory_space<vmem>>, vector<1x1x128xf32>
    %c5 = arith.constant 5 : index
    %c0_28 = arith.constant 0 : index
    %c0_29 = arith.constant 0 : index
    %11 = vector.load %arg10[%c5, %c0_28, %c0_29] : memref<8x1x128xf32, #tpu.memory_space<vmem>>, vector<1x1x128xf32>
    tpu.vector_store %arg10[%c5, %c0_28, %c0_29], %10 {strides = array<i32>} : memref<8x1x128xf32, #tpu.memory_space<vmem>>, vector<1x1x128xf32>,
    %c0_30 = arith.constant 0 : index
    %c0_31 = arith.constant 0 : index
    %c0_32 = arith.constant 0 : index
    %12 = vector.load %arg8[%c0_30, %c0_31, %c0_32] : memref<1x1x128xf32, #tpu.memory_space<vmem>>, vector<1x1x128xf32>
    %c6 = arith.constant 6 : index
    %c0_33 = arith.constant 0 : index
    %c0_34 = arith.constant 0 : index
    %13 = vector.load %arg10[%c6, %c0_33, %c0_34] : memref<8x1x128xf32, #tpu.memory_space<vmem>>, vector<1x1x128xf32>
    tpu.vector_store %arg10[%c6, %c0_33, %c0_34], %12 {strides = array<i32>} : memref<8x1x128xf32, #tpu.memory_space<vmem>>, vector<1x1x128xf32>,
    %c0_35 = arith.constant 0 : index
    %c0_36 = arith.constant 0 : index
    %c0_37 = arith.constant 0 : index
    %14 = vector.load %arg9[%c0_35, %c0_36, %c0_37] : memref<1x1x128xf32, #tpu.memory_space<vmem>>, vector<1x1x128xf32>
    %c7 = arith.constant 7 : index
    %c0_38 = arith.constant 0 : index
    %c0_39 = arith.constant 0 : index
    %15 = vector.load %arg10[%c7, %c0_38, %c0_39] : memref<8x1x128xf32, #tpu.memory_space<vmem>>, vector<1x1x128xf32>
    tpu.vector_store %arg10[%c7, %c0_38, %c0_39], %14 {strides = array<i32>} : memref<8x1x128xf32, #tpu.memory_space<vmem>>, vector<1x1x128xf32>,
    return
  }
  func.func @transform_0(%arg0: i32, %arg1: memref<16xi32, #tpu.memory_space<smem>>) -> (i32, i32, i32) {
    %c8_i32 = arith.constant 8 : i32
    %0 = arith.muli %arg0, %c8_i32 : i32
    %c0_i32 = arith.constant 0 : i32
    %1 = arith.addi %0, %c0_i32 : i32
    %2 = arith.index_cast %1 : i32 to index
    %3 = memref.load %arg1[%2] : memref<16xi32, #tpu.memory_space<smem>>
    %c0_i32_0 = arith.constant 0 : i32
    %c0_i32_1 = arith.constant 0 : i32
    %c0_i32_2 = arith.constant 0 : i32
    return %3, %c0_i32_0, %c0_i32_1 : i32, i32, i32
  }
  func.func @transform_1(%arg0: i32, %arg1: memref<16xi32, #tpu.memory_space<smem>>) -> (i32, i32, i32) {
    %c8_i32 = arith.constant 8 : i32
    %0 = arith.muli %arg0, %c8_i32 : i32
    %c1_i32 = arith.constant 1 : i32
    %1 = arith.addi %0, %c1_i32 : i32
    %2 = arith.index_cast %1 : i32 to index
    %3 = memref.load %arg1[%2] : memref<16xi32, #tpu.memory_space<smem>>
    %c0_i32 = arith.constant 0 : i32
    %c0_i32_0 = arith.constant 0 : i32
    %c0_i32_1 = arith.constant 0 : i32
    return %3, %c0_i32, %c0_i32_0 : i32, i32, i32
  }
  func.func @transform_2(%arg0: i32, %arg1: memref<16xi32, #tpu.memory_space<smem>>) -> (i32, i32, i32) {
    %c8_i32 = arith.constant 8 : i32
    %0 = arith.muli %arg0, %c8_i32 : i32
    %c2_i32 = arith.constant 2 : i32
    %1 = arith.addi %0, %c2_i32 : i32
    %2 = arith.index_cast %1 : i32 to index
    %3 = memref.load %arg1[%2] : memref<16xi32, #tpu.memory_space<smem>>
    %c0_i32 = arith.constant 0 : i32
    %c0_i32_0 = arith.constant 0 : i32
    %c0_i32_1 = arith.constant 0 : i32
    return %3, %c0_i32, %c0_i32_0 : i32, i32, i32
  }
  func.func @transform_3(%arg0: i32, %arg1: memref<16xi32, #tpu.memory_space<smem>>) -> (i32, i32, i32) {
    %c8_i32 = arith.constant 8 : i32
    %0 = arith.muli %arg0, %c8_i32 : i32
    %c3_i32 = arith.constant 3 : i32
    %1 = arith.addi %0, %c3_i32 : i32
    %2 = arith.index_cast %1 : i32 to index
    %3 = memref.load %arg1[%2] : memref<16xi32, #tpu.memory_space<smem>>
    %c0_i32 = arith.constant 0 : i32
    %c0_i32_0 = arith.constant 0 : i32
    %c0_i32_1 = arith.constant 0 : i32
    return %3, %c0_i32, %c0_i32_0 : i32, i32, i32
  }
  func.func @transform_4(%arg0: i32, %arg1: memref<16xi32, #tpu.memory_space<smem>>) -> (i32, i32, i32) {
    %c8_i32 = arith.constant 8 : i32
    %0 = arith.muli %arg0, %c8_i32 : i32
    %c4_i32 = arith.constant 4 : i32
    %1 = arith.addi %0, %c4_i32 : i32
    %2 = arith.index_cast %1 : i32 to index
    %3 = memref.load %arg1[%2] : memref<16xi32, #tpu.memory_space<smem>>
    %c0_i32 = arith.constant 0 : i32
    %c0_i32_0 = arith.constant 0 : i32
    %c0_i32_1 = arith.constant 0 : i32
    return %3, %c0_i32, %c0_i32_0 : i32, i32, i32
  }
  func.func @transform_5(%arg0: i32, %arg1: memref<16xi32, #tpu.memory_space<smem>>) -> (i32, i32, i32) {
    %c8_i32 = arith.constant 8 : i32
    %0 = arith.muli %arg0, %c8_i32 : i32
    %c5_i32 = arith.constant 5 : i32
    %1 = arith.addi %0, %c5_i32 : i32
    %2 = arith.index_cast %1 : i32 to index
    %3 = memref.load %arg1[%2] : memref<16xi32, #tpu.memory_space<smem>>
    %c0_i32 = arith.constant 0 : i32
    %c0_i32_0 = arith.constant 0 : i32
    %c0_i32_1 = arith.constant 0 : i32
    return %3, %c0_i32, %c0_i32_0 : i32, i32, i32
  }
  func.func @transform_6(%arg0: i32, %arg1: memref<16xi32, #tpu.memory_space<smem>>) -> (i32, i32, i32) {
    %c8_i32 = arith.constant 8 : i32
    %0 = arith.muli %arg0, %c8_i32 : i32
    %c6_i32 = arith.constant 6 : i32
    %1 = arith.addi %0, %c6_i32 : i32
    %2 = arith.index_cast %1 : i32 to index
    %3 = memref.load %arg1[%2] : memref<16xi32, #tpu.memory_space<smem>>
    %c0_i32 = arith.constant 0 : i32
    %c0_i32_0 = arith.constant 0 : i32
    %c0_i32_1 = arith.constant 0 : i32
    return %3, %c0_i32, %c0_i32_0 : i32, i32, i32
  }
  func.func @transform_7(%arg0: i32, %arg1: memref<16xi32, #tpu.memory_space<smem>>) -> (i32, i32, i32) {
    %c8_i32 = arith.constant 8 : i32
    %0 = arith.muli %arg0, %c8_i32 : i32
    %c7_i32 = arith.constant 7 : i32
    %1 = arith.addi %0, %c7_i32 : i32
    %2 = arith.index_cast %1 : i32 to index
    %3 = memref.load %arg1[%2] : memref<16xi32, #tpu.memory_space<smem>>
    %c0_i32 = arith.constant 0 : i32
    %c0_i32_0 = arith.constant 0 : i32
    %c0_i32_1 = arith.constant 0 : i32
    return %3, %c0_i32, %c0_i32_0 : i32, i32, i32
  }
  func.func @transform_8(%arg0: i32, %arg1: memref<16xi32, #tpu.memory_space<smem>>) -> (i32, i32, i32) {
    %c0_i32 = arith.constant 0 : i32
    %c0_i32_0 = arith.constant 0 : i32
    %c0_i32_1 = arith.constant 0 : i32
    return %arg0, %c0_i32, %c0_i32_0 : i32, i32, i32
  }
}

</mosaic_0001>

<llo_original>
// kernel: tpu_custom_call.1
$region0: #{tpu_custom_call.1}
  #allocation0 [shape = 'u32[]', space=smem, size = 0x4, offset = 0x4, fixed_abs, tag = 'smem constant byte address 0x4 - core index']
  #allocation1 [shape = 'u32[144,128]{1,0:T(1,128)}', space=vmem, size = 0x12000, scoped, tag = 'internal scratch']
  #allocation2 [shape = 's32[1]{0}', space=sflag, size = 0x4, scoped, tag = 'scoped memory for tpu_custom_call.1']
  #allocation3 [shape = 'u8[512]{0}', space=smem, size = 0x200, scoped, tag = 'prefetched SMEM operand 0']
  %s0 = inlined_call_operand.hbm [shape: s32[16], index: 0, kind: input, shape index: {}]
  %s1 = inlined_call_operand.hbm [shape: f32[32,1,128], index: 1, kind: input, shape index: {}]
  %s2 = inlined_call_operand.hbm [shape: f32[32,1,128], index: 2, kind: input, shape index: {}]
  %s3 = inlined_call_operand.hbm [shape: f32[32,1,128], index: 3, kind: input, shape index: {}]
  %s4 = inlined_call_operand.hbm [shape: f32[32,1,128], index: 4, kind: input, shape index: {}]
  %s5 = inlined_call_operand.hbm [shape: f32[32,1,128], index: 5, kind: input, shape index: {}]
  %s6 = inlined_call_operand.hbm [shape: f32[32,1,128], index: 6, kind: input, shape index: {}]
  %s7 = inlined_call_operand.hbm [shape: f32[32,1,128], index: 7, kind: input, shape index: {}]
  %s8 = inlined_call_operand.hbm [shape: f32[32,1,128], index: 8, kind: input, shape index: {}]
  %s9 = inlined_call_operand.hbm [shape: f32[16,1,128], index: 9, kind: output, shape index: {}]
  %s10 = sld [smem:[#allocation0]]
  $region97: #{tpu_custom_call.1} parent=0
    _
  %s12 = ssub.s32 1, %s10
  %s13 = scalar_select 0, %s12, %s10
  %15 = dma.hbm_to_smem %s0, 16, [#allocation3], [#allocation2]
  %16 = dma.done [#allocation2], 16
  %17 = sfence
  $region1: #{tpu_custom_call.1} parent=0
    #allocation4 [shape = 'u8[1024]{0}', space=vmem, size = 0x400, scoped, tag = 'input window, operand 1']
    #allocation5 [shape = 's32[2]{0}', space=sflag, size = 0x8, scoped, tag = 'scoped memory for tpu_custom_call.1']
    #allocation6 [shape = 's32[2]{0}', space=sflag, size = 0x8, scoped, tag = 'scoped memory for tpu_custom_call.1']
    #allocation7 [shape = 'u8[1024]{0}', space=vmem, size = 0x400, scoped, tag = 'input window, operand 2']
    #allocation8 [shape = 's32[2]{0}', space=sflag, size = 0x8, scoped, tag = 'scoped memory for tpu_custom_call.1']
    #allocation9 [shape = 'u8[1024]{0}', space=vmem, size = 0x400, scoped, tag = 'input window, operand 3']
    #allocation10 [shape = 'u8[1024]{0}', space=vmem, size = 0x400, scoped, tag = 'input window, operand 4']
    #allocation11 [shape = 's32[2]{0}', space=sflag, size = 0x8, scoped, tag = 'scoped memory for tpu_custom_call.1']
    #allocation12 [shape = 'u8[1024]{0}', space=vmem, size = 0x400, scoped, tag = 'input window, operand 5']
    #allocation13 [shape = 'u8[1024]{0}', space=vmem, size = 0x400, scoped, tag = 'input window, operand 6']
    #allocation14 [shape = 's32[2]{0}', space=sflag, size = 0x8, scoped, tag = 'scoped memory for tpu_custom_call.1']
    #allocation15 [shape = 'u8[1024]{0}', space=vmem, size = 0x400, scoped, tag = 'input window, operand 7']
    #allocation16 [shape = 'u8[1024]{0}', space=vmem, size = 0x400, scoped, tag = 'input window, operand 8']
    #allocation17 [shape = 's32[2]{0}', space=sflag, size = 0x8, scoped, tag = 'scoped memory for tpu_custom_call.1']
    #allocation18 [shape = 'u8[8192]{0}', space=vmem, size = 0x2000, scoped, tag = 'output window, operand 0']
    %18 = vsyncpa [#allocation5], 0
    %s19 = scalar_lea.sflag [#allocation5], 1
    %20 = vsyncpa %s19, 0
    %21 = vsyncpa [#allocation8], 0
    %s22 = scalar_lea.sflag [#allocation8], 1
    %23 = vsyncpa %s22, 0
    %24 = vsyncpa [#allocation11], 0
    %s25 = scalar_lea.sflag [#allocation11], 1
    %26 = vsyncpa %s25, 0
    %27 = vsyncpa [#allocation14], 0
    %s28 = scalar_lea.sflag [#allocation14], 1
    %29 = vsyncpa %s28, 0
    %30 = vsyncpa [#allocation17], 0
    %s31 = scalar_lea.sflag [#allocation17], 1
    %32 = vsyncpa %s31, 0
    %33 = vsyncpa [#allocation6], 0
    %s34 = scalar_lea.sflag [#allocation6], 1
    %35 = vsyncpa %s34, 0
    loop: start=0, step=1, limit=4
    $region2: #{tpu_custom_call.1} parent=1 // loop_pre_header
      _
    $region3: #{tpu_custom_call.1} parent=1 // loop_header
      %s37 = sphi 0, %s41
      %p38 = scmp.ge.s32.totalorder %s37, 4
      %s51 = sphi 0, %s53
      %s54 = sphi 0, %s51
      %s55 = sphi 0, %s54
      %s71 = sphi 0, %s55
      %s83 = sphi 0, %s85
      %s86 = sphi 0, %s83
      %s87 = sphi 0, %s86
      %s103 = sphi 0, %s87
      %s115 = sphi 0, %s117
      %s118 = sphi 0, %s115
      %s119 = sphi 0, %s118
      %s135 = sphi 0, %s119
      %s147 = sphi 0, %s149
      %s150 = sphi 0, %s147
      %s151 = sphi 0, %s150
      %s167 = sphi 0, %s151
      %s179 = sphi 0, %s181
      %s182 = sphi 0, %s179
      %s183 = sphi 0, %s182
      %s199 = sphi 0, %s183
      %s211 = sphi 0, %s213
      %s214 = sphi 0, %s211
      %s215 = sphi 0, %s214
      %s231 = sphi 0, %s215
      %s243 = sphi 0, %s245
      %s246 = sphi 0, %s243
      %s247 = sphi 0, %s246
      %s263 = sphi 0, %s247
      %s275 = sphi 0, %s277
      %s278 = sphi 0, %s275
      %s279 = sphi 0, %s278
      %s295 = sphi 0, %s279
      %s301 = sphi 0, %s303
      %s304 = sphi 0, %s301
      %s305 = sphi 0, %s304
      %s321 = sphi 0, %s305
    $region4: #{tpu_custom_call.1} parent=1 // loop_header_branch
      %40 = sbr.rel (%p38) target = $region8
    $region5: #{tpu_custom_call.1} parent=1 // loop_body
      %s42 = ssub.s32 %s37, 1
      %s43 = ssub.s32 %s37, 2
      %s44 = sadd.s32 %s37, 1
      %s45 = smul.u32 %s37, 8
      %s46 = sld [smem:[#allocation3 + %s45]]
      %s47 = smul.u32 %s44, 8
      %s48 = sld [smem:[#allocation3 + %s47]]
      %s49 = ssub.s32 %s46, %s48
      %p50 = scmp.eq.s32.totalorder %s49, 0
      %s52 = sadd.s32 %s51, 1
      %s53 = scalar_select %p50, %s51, %s52
      %p56 = pneg %p50
      %p57 = scmp.eq.s32.totalorder %s37, 1
      %p58 = por %p56, %p57
      %p59 = scmp.ne.s32.totalorder %s51, %s54
      %p60 = scmp.eq.s32.totalorder %s37, 0
      %p61 = por %p59, %p60
      %p62 = scmp.ne.s32.totalorder %s51, %s54
      %p63 = scmp.eq.s32.totalorder %s42, 1
      %p64 = por %p62, %p63
      %p65 = scmp.ne.s32.totalorder %s54, %s55
      %p66 = scmp.eq.s32.totalorder %s42, 0
      %p67 = por %p65, %p66
      %p68 = scmp.ne.s32.totalorder %s54, %s55
      %p69 = scmp.eq.s32.totalorder %s43, 1
      %p70 = por %p68, %p69
      %p72 = scmp.ne.s32.totalorder %s55, %s71
      %p73 = scmp.eq.s32.totalorder %s43, 0
      %p74 = por %p72, %p73
      %s75 = smul.u32 %s37, 8
      %s76 = sadd.s32 %s75, 1
      %s77 = sld [smem:[#allocation3 + %s76]]
      %s78 = smul.u32 %s44, 8
      %s79 = sadd.s32 %s78, 1
      %s80 = sld [smem:[#allocation3 + %s79]]
      %s81 = ssub.s32 %s77, %s80
      %p82 = scmp.eq.s32.totalorder %s81, 0
      %s84 = sadd.s32 %s83, 1
      %s85 = scalar_select %p82, %s83, %s84
      %p88 = pneg %p82
      %p89 = scmp.eq.s32.totalorder %s37, 1
      %p90 = por %p88, %p89
      %p91 = scmp.ne.s32.totalorder %s83, %s86
      %p92 = scmp.eq.s32.totalorder %s37, 0
      %p93 = por %p91, %p92
      %p94 = scmp.ne.s32.totalorder %s83, %s86
      %p95 = scmp.eq.s32.totalorder %s42, 1
      %p96 = por %p94, %p95
      %p97 = scmp.ne.s32.totalorder %s86, %s87
      %p98 = scmp.eq.s32.totalorder %s42, 0
      %p99 = por %p97, %p98
      %p100 = scmp.ne.s32.totalorder %s86, %s87
      %p101 = scmp.eq.s32.totalorder %s43, 1
      %p102 = por %p100, %p101
      %p104 = scmp.ne.s32.totalorder %s87, %s103
      %p105 = scmp.eq.s32.totalorder %s43, 0
      %p106 = por %p104, %p105
      %s107 = smul.u32 %s37, 8
      %s108 = sadd.s32 %s107, 2
      %s109 = sld [smem:[#allocation3 + %s108]]
      %s110 = smul.u32 %s44, 8
      %s111 = sadd.s32 %s110, 2
      %s112 = sld [smem:[#allocation3 + %s111]]
      %s113 = ssub.s32 %s109, %s112
      %p114 = scmp.eq.s32.totalorder %s113, 0
      %s116 = sadd.s32 %s115, 1
      %s117 = scalar_select %p114, %s115, %s116
      %p120 = pneg %p114
      %p121 = scmp.eq.s32.totalorder %s37, 1
      %p122 = por %p120, %p121
      %p123 = scmp.ne.s32.totalorder %s115, %s118
      %p124 = scmp.eq.s32.totalorder %s37, 0
      %p125 = por %p123, %p124
      %p126 = scmp.ne.s32.totalorder %s115, %s118
      %p127 = scmp.eq.s32.totalorder %s42, 1
      %p128 = por %p126, %p127
      %p129 = scmp.ne.s32.totalorder %s118, %s119
      %p130 = scmp.eq.s32.totalorder %s42, 0
      %p131 = por %p129, %p130
      %p132 = scmp.ne.s32.totalorder %s118, %s119
      %p133 = scmp.eq.s32.totalorder %s43, 1
      %p134 = por %p132, %p133
      %p136 = scmp.ne.s32.totalorder %s119, %s135
      %p137 = scmp.eq.s32.totalorder %s43, 0
      %p138 = por %p136, %p137
      %s139 = smul.u32 %s37, 8
      %s140 = sadd.s32 %s139, 3
      %s141 = sld [smem:[#allocation3 + %s140]]
      %s142 = smul.u32 %s44, 8
      %s143 = sadd.s32 %s142, 3
      %s144 = sld [smem:[#allocation3 + %s143]]
      %s145 = ssub.s32 %s141, %s144
      %p146 = scmp.eq.s32.totalorder %s145, 0
      %s148 = sadd.s32 %s147, 1
      %s149 = scalar_select %p146, %s147, %s148
      %p152 = pneg %p146
      %p153 = scmp.eq.s32.totalorder %s37, 1
      %p154 = por %p152, %p153
      %p155 = scmp.ne.s32.totalorder %s147, %s150
      %p156 = scmp.eq.s32.totalorder %s37, 0
      %p157 = por %p155, %p156
      %p158 = scmp.ne.s32.totalorder %s147, %s150
      %p159 = scmp.eq.s32.totalorder %s42, 1
      %p160 = por %p158, %p159
      %p161 = scmp.ne.s32.totalorder %s150, %s151
      %p162 = scmp.eq.s32.totalorder %s42, 0
      %p163 = por %p161, %p162
      %p164 = scmp.ne.s32.totalorder %s150, %s151
      %p165 = scmp.eq.s32.totalorder %s43, 1
      %p166 = por %p164, %p165
      %p168 = scmp.ne.s32.totalorder %s151, %s167
      %p169 = scmp.eq.s32.totalorder %s43, 0
      %p170 = por %p168, %p169
      %s171 = smul.u32 %s37, 8
      %s172 = sadd.s32 %s171, 4
      %s173 = sld [smem:[#allocation3 + %s172]]
      %s174 = smul.u32 %s44, 8
      %s175 = sadd.s32 %s174, 4
      %s176 = sld [smem:[#allocation3 + %s175]]
      %s177 = ssub.s32 %s173, %s176
      %p178 = scmp.eq.s32.totalorder %s177, 0
      %s180 = sadd.s32 %s179, 1
      %s181 = scalar_select %p178, %s179, %s180
      %p184 = pneg %p178
      %p185 = scmp.eq.s32.totalorder %s37, 1
      %p186 = por %p184, %p185
      %p187 = scmp.ne.s32.totalorder %s179, %s182
      %p188 = scmp.eq.s32.totalorder %s37, 0
      %p189 = por %p187, %p188
      %p190 = scmp.ne.s32.totalorder %s179, %s182
      %p191 = scmp.eq.s32.totalorder %s42, 1
      %p192 = por %p190, %p191
      %p193 = scmp.ne.s32.totalorder %s182, %s183
      %p194 = scmp.eq.s32.totalorder %s42, 0
      %p195 = por %p193, %p194
      %p196 = scmp.ne.s32.totalorder %s182, %s183
      %p197 = scmp.eq.s32.totalorder %s43, 1
      %p198 = por %p196, %p197
      %p200 = scmp.ne.s32.totalorder %s183, %s199
      %p201 = scmp.eq.s32.totalorder %s43, 0
      %p202 = por %p200, %p201
      %s203 = smul.u32 %s37, 8
      %s204 = sadd.s32 %s203, 5
      %s205 = sld [smem:[#allocation3 + %s204]]
      %s206 = smul.u32 %s44, 8
      %s207 = sadd.s32 %s206, 5
      %s208 = sld [smem:[#allocation3 + %s207]]
      %s209 = ssub.s32 %s205, %s208
      %p210 = scmp.eq.s32.totalorder %s209, 0
      %s212 = sadd.s32 %s211, 1
      %s213 = scalar_select %p210, %s211, %s212
      %p216 = pneg %p210
      %p217 = scmp.eq.s32.totalorder %s37, 1
      %p218 = por %p216, %p217
      %p219 = scmp.ne.s32.totalorder %s211, %s214
      %p220 = scmp.eq.s32.totalorder %s37, 0
      %p221 = por %p219, %p220
      %p222 = scmp.ne.s32.totalorder %s211, %s214
      %p223 = scmp.eq.s32.totalorder %s42, 1
      %p224 = por %p222, %p223
      %p225 = scmp.ne.s32.totalorder %s214, %s215
      %p226 = scmp.eq.s32.totalorder %s42, 0
      %p227 = por %p225, %p226
      %p228 = scmp.ne.s32.totalorder %s214, %s215
      %p229 = scmp.eq.s32.totalorder %s43, 1
      %p230 = por %p228, %p229
      %p232 = scmp.ne.s32.totalorder %s215, %s231
      %p233 = scmp.eq.s32.totalorder %s43, 0
      %p234 = por %p232, %p233
      %s235 = smul.u32 %s37, 8
      %s236 = sadd.s32 %s235, 6
      %s237 = sld [smem:[#allocation3 + %s236]]
      %s238 = smul.u32 %s44, 8
      %s239 = sadd.s32 %s238, 6
      %s240 = sld [smem:[#allocation3 + %s239]]
      %s241 = ssub.s32 %s237, %s240
      %p242 = scmp.eq.s32.totalorder %s241, 0
      %s244 = sadd.s32 %s243, 1
      %s245 = scalar_select %p242, %s243, %s244
      %p248 = pneg %p242
      %p249 = scmp.eq.s32.totalorder %s37, 1
      %p250 = por %p248, %p249
      %p251 = scmp.ne.s32.totalorder %s243, %s246
      %p252 = scmp.eq.s32.totalorder %s37, 0
      %p253 = por %p251, %p252
      %p254 = scmp.ne.s32.totalorder %s243, %s246
      %p255 = scmp.eq.s32.totalorder %s42, 1
      %p256 = por %p254, %p255
      %p257 = scmp.ne.s32.totalorder %s246, %s247
      %p258 = scmp.eq.s32.totalorder %s42, 0
      %p259 = por %p257, %p258
      %p260 = scmp.ne.s32.totalorder %s246, %s247
      %p261 = scmp.eq.s32.totalorder %s43, 1
      %p262 = por %p260, %p261
      %p264 = scmp.ne.s32.totalorder %s247, %s263
      %p265 = scmp.eq.s32.totalorder %s43, 0
      %p266 = por %p264, %p265
      %s267 = smul.u32 %s37, 8
      %s268 = sadd.s32 %s267, 7
      %s269 = sld [smem:[#allocation3 + %s268]]
      %s270 = smul.u32 %s44, 8
      %s271 = sadd.s32 %s270, 7
      %s272 = sld [smem:[#allocation3 + %s271]]
      %s273 = ssub.s32 %s269, %s272
      %p274 = scmp.eq.s32.totalorder %s273, 0
      %s276 = sadd.s32 %s275, 1
      %s277 = scalar_select %p274, %s275, %s276
      %p280 = pneg %p274
      %p281 = scmp.eq.s32.totalorder %s37, 1
      %p282 = por %p280, %p281
      %p283 = scmp.ne.s32.totalorder %s275, %s278
      %p284 = scmp.eq.s32.totalorder %s37, 0
      %p285 = por %p283, %p284
      %p286 = scmp.ne.s32.totalorder %s275, %s278
      %p287 = scmp.eq.s32.totalorder %s42, 1
      %p288 = por %p286, %p287
      %p289 = scmp.ne.s32.totalorder %s278, %s279
      %p290 = scmp.eq.s32.totalorder %s42, 0
      %p291 = por %p289, %p290
      %p292 = scmp.ne.s32.totalorder %s278, %s279
      %p293 = scmp.eq.s32.totalorder %s43, 1
      %p294 = por %p292, %p293
      %p296 = scmp.ne.s32.totalorder %s279, %s295
      %p297 = scmp.eq.s32.totalorder %s43, 0
      %p298 = por %p296, %p297
      %s299 = ssub.s32 %s37, %s44
      %p300 = scmp.eq.s32.totalorder %s299, 0
      %s302 = sadd.s32 %s301, 1
      %s303 = scalar_select %p300, %s301, %s302
      %p306 = pneg %p300
      %p307 = scmp.eq.s32.totalorder %s37, 1
      %p308 = por %p306, %p307
      %p309 = scmp.ne.s32.totalorder %s301, %s304
      %p310 = scmp.eq.s32.totalorder %s37, 0
      %p311 = por %p309, %p310
      %p312 = scmp.ne.s32.totalorder %s301, %s304
      %p313 = scmp.eq.s32.totalorder %s42, 1
      %p314 = por %p312, %p313
      %p315 = scmp.ne.s32.totalorder %s304, %s305
      %p316 = scmp.eq.s32.totalorder %s42, 0
      %p317 = por %p315, %p316
      %p318 = scmp.ne.s32.totalorder %s304, %s305
      %p319 = scmp.eq.s32.totalorder %s43, 1
      %p320 = por %p318, %p319
      %p322 = scmp.ne.s32.totalorder %s305, %s321
      %p323 = scmp.eq.s32.totalorder %s43, 0
      %p324 = por %p322, %p323
      %p325 = scmp.le.s32.totalorder 1, %s37
      %p326 = scmp.lt.s32.totalorder %s37, 3
      %p327 = pnand %p325, %p326
      %p328 = pneg %p327
      // Predicated region
      $region9: #{tpu_custom_call.1} parent=5 // pred_check
        _
      $region10: #{tpu_custom_call.1} parent=5 // pred_check_branch
        %330 = sbr.rel (%p327) target = $region12
      $region11: #{tpu_custom_call.1} parent=5 // pred_region
        %s331 = ssub.s32 %s37, 1
      $region12: #{tpu_custom_call.1} parent=5 // pred_fallthru
        _
      %p332 = scmp.lt.s32.totalorder %s37, 2
      // Predicated region
      $region13: #{tpu_custom_call.1} parent=5 // pred_check
        %p333 = pneg %p332
      $region14: #{tpu_custom_call.1} parent=5 // pred_check_branch
        %335 = sbr.rel (%p333) target = $region16
      $region15: #{tpu_custom_call.1} parent=5 // pred_region
        // Predicated region
        $region17: #{tpu_custom_call.1} parent=15 // pred_check
          %p336 = pneg %p61
        $region18: #{tpu_custom_call.1} parent=15 // pred_check_branch
          %338 = sbr.rel (%p336) target = $region20
        $region19: #{tpu_custom_call.1} parent=15 // pred_region
          %s339 = sand.u32 %s51, 1
          %s340 = scalar_lea.sflag [#allocation5], %s339
          %s341 = sand.u32 %s51, 1
          %s342 = scalar_lea.vmem [#allocation4], %s341
          %s343 = smul.u32 %s37, 8
          %s344 = sld [smem:[#allocation3 + %s343]]
          %s346 = ssub.s32 16, 16
          %347 = vsyncadd %s340, %s346
          %s348 = smul.addr %s344, 16
          %s349 = scalar_lea.hbm %s1, %s348
          %s351 = sshll.u32 %s342, 4
          %s352 = int_to_ptr.vmem [resolvable:$true] %s351
          %354 = dma.hbm_to_vmem [thread:$0]  %s349, 16, %s352, %s340
        $region20: #{tpu_custom_call.1} parent=15 // pred_fallthru
          _
        // Predicated region
        $region21: #{tpu_custom_call.1} parent=15 // pred_check
          %p355 = pneg %p93
        $region22: #{tpu_custom_call.1} parent=15 // pred_check_branch
          %357 = sbr.rel (%p355) target = $region24
        $region23: #{tpu_custom_call.1} parent=15 // pred_region
          %s358 = sand.u32 %s37, 1
          %s359 = scalar_lea.sflag [#allocation8], %s358
          %s360 = sand.u32 %s83, 1
          %s361 = scalar_lea.vmem [#allocation7], %s360
          %s362 = smul.u32 %s37, 8
          %s363 = sadd.s32 %s362, 1
          %s364 = sld [smem:[#allocation3 + %s363]]
          %s366 = ssub.s32 16, 16
          %367 = vsyncadd %s359, %s366
          %s368 = smul.addr %s364, 16
          %s369 = scalar_lea.hbm %s2, %s368
          %s371 = sshll.u32 %s361, 4
          %s372 = int_to_ptr.vmem [resolvable:$true] %s371
          %374 = dma.hbm_to_vmem [thread:$0]  %s369, 16, %s372, %s359
        $region24: #{tpu_custom_call.1} parent=15 // pred_fallthru
          _
        // Predicated region
        $region25: #{tpu_custom_call.1} parent=15 // pred_check
          %p375 = pneg %p125
        $region26: #{tpu_custom_call.1} parent=15 // pred_check_branch
          %377 = sbr.rel (%p375) target = $region28
        $region27: #{tpu_custom_call.1} parent=15 // pred_region
          %s378 = sand.u32 %s37, 1
          %s379 = scalar_lea.sflag [#allocation8], %s378
          %s380 = sand.u32 %s115, 1
          %s381 = scalar_lea.vmem [#allocation9], %s380
          %s382 = smul.u32 %s37, 8
          %s383 = sadd.s32 %s382, 2
          %s384 = sld [smem:[#allocation3 + %s383]]
          %s386 = ssub.s32 16, 16
          %387 = vsyncadd %s379, %s386
          %s388 = smul.addr %s384, 16
          %s389 = scalar_lea.hbm %s3, %s388
          %s391 = sshll.u32 %s381, 4
          %s392 = int_to_ptr.vmem [resolvable:$true] %s391
          %394 = dma.hbm_to_vmem [thread:$0]  %s389, 16, %s392, %s379
        $region28: #{tpu_custom_call.1} parent=15 // pred_fallthru
          _
        // Predicated region
        $region29: #{tpu_custom_call.1} parent=15 // pred_check
          %p395 = pneg %p157
        $region30: #{tpu_custom_call.1} parent=15 // pred_check_branch
          %397 = sbr.rel (%p395) target = $region32
        $region31: #{tpu_custom_call.1} parent=15 // pred_region
          %s398 = sand.u32 %s37, 1
          %s399 = scalar_lea.sflag [#allocation11], %s398
          %s400 = sand.u32 %s147, 1
          %s401 = scalar_lea.vmem [#allocation10], %s400
          %s402 = smul.u32 %s37, 8
          %s403 = sadd.s32 %s402, 3
          %s404 = sld [smem:[#allocation3 + %s403]]
          %s406 = ssub.s32 16, 16
          %407 = vsyncadd %s399, %s406
          %s408 = smul.addr %s404, 16
          %s409 = scalar_lea.hbm %s4, %s408
          %s411 = sshll.u32 %s401, 4
          %s412 = int_to_ptr.vmem [resolvable:$true] %s411
          %414 = dma.hbm_to_vmem [thread:$0]  %s409, 16, %s412, %s399
        $region32: #{tpu_custom_call.1} parent=15 // pred_fallthru
          _
        // Predicated region
        $region33: #{tpu_custom_call.1} parent=15 // pred_check
          %p415 = pneg %p189
        $region34: #{tpu_custom_call.1} parent=15 // pred_check_branch
          %417 = sbr.rel (%p415) target = $region36
        $region35: #{tpu_custom_call.1} parent=15 // pred_region
          %s418 = sand.u32 %s37, 1
          %s419 = scalar_lea.sflag [#allocation11], %s418
          %s420 = sand.u32 %s179, 1
          %s421 = scalar_lea.vmem [#allocation12], %s420
          %s422 = smul.u32 %s37, 8
          %s423 = sadd.s32 %s422, 4
          %s424 = sld [smem:[#allocation3 + %s423]]
          %s426 = ssub.s32 16, 16
          %427 = vsyncadd %s419, %s426
          %s428 = smul.addr %s424, 16
          %s429 = scalar_lea.hbm %s5, %s428
          %s431 = sshll.u32 %s421, 4
          %s432 = int_to_ptr.vmem [resolvable:$true] %s431
          %434 = dma.hbm_to_vmem [thread:$0]  %s429, 16, %s432, %s419
        $region36: #{tpu_custom_call.1} parent=15 // pred_fallthru
          _
        // Predicated region
        $region37: #{tpu_custom_call.1} parent=15 // pred_check
          %p435 = pneg %p221
        $region38: #{tpu_custom_call.1} parent=15 // pred_check_branch
          %437 = sbr.rel (%p435) target = $region40
        $region39: #{tpu_custom_call.1} parent=15 // pred_region
          %s438 = sand.u32 %s37, 1
          %s439 = scalar_lea.sflag [#allocation14], %s438
          %s440 = sand.u32 %s211, 1
          %s441 = scalar_lea.vmem [#allocation13], %s440
          %s442 = smul.u32 %s37, 8
          %s443 = sadd.s32 %s442, 5
          %s444 = sld [smem:[#allocation3 + %s443]]
          %s446 = ssub.s32 16, 16
          %447 = vsyncadd %s439, %s446
          %s448 = smul.addr %s444, 16
          %s449 = scalar_lea.hbm %s6, %s448
          %s451 = sshll.u32 %s441, 4
          %s452 = int_to_ptr.vmem [resolvable:$true] %s451
          %454 = dma.hbm_to_vmem [thread:$0]  %s449, 16, %s452, %s439
        $region40: #{tpu_custom_call.1} parent=15 // pred_fallthru
          _
        // Predicated region
        $region41: #{tpu_custom_call.1} parent=15 // pred_check
          %p455 = pneg %p253
        $region42: #{tpu_custom_call.1} parent=15 // pred_check_branch
          %457 = sbr.rel (%p455) target = $region44
        $region43: #{tpu_custom_call.1} parent=15 // pred_region
          %s458 = sand.u32 %s37, 1
          %s459 = scalar_lea.sflag [#allocation14], %s458
          %s460 = sand.u32 %s243, 1
          %s461 = scalar_lea.vmem [#allocation15], %s460
          %s462 = smul.u32 %s37, 8
          %s463 = sadd.s32 %s462, 6
          %s464 = sld [smem:[#allocation3 + %s463]]
          %s466 = ssub.s32 16, 16
          %467 = vsyncadd %s459, %s466
          %s468 = smul.addr %s464, 16
          %s469 = scalar_lea.hbm %s7, %s468
          %s471 = sshll.u32 %s461, 4
          %s472 = int_to_ptr.vmem [resolvable:$true] %s471
          %474 = dma.hbm_to_vmem [thread:$0]  %s469, 16, %s472, %s459
        $region44: #{tpu_custom_call.1} parent=15 // pred_fallthru
          _
        // Predicated region
        $region45: #{tpu_custom_call.1} parent=15 // pred_check
          %p475 = pneg %p285
        $region46: #{tpu_custom_call.1} parent=15 // pred_check_branch
          %477 = sbr.rel (%p475) target = $region48
        $region47: #{tpu_custom_call.1} parent=15 // pred_region
          %s478 = sand.u32 %s275, 1
          %s479 = scalar_lea.sflag [#allocation17], %s478
          %s480 = sand.u32 %s275, 1
          %s481 = scalar_lea.vmem [#allocation16], %s480
          %s482 = smul.u32 %s37, 8
          %s483 = sadd.s32 %s482, 7
          %s484 = sld [smem:[#allocation3 + %s483]]
          %s486 = ssub.s32 16, 16
          %487 = vsyncadd %s479, %s486
          %s488 = smul.addr %s484, 16
          %s489 = scalar_lea.hbm %s8, %s488
          %s491 = sshll.u32 %s481, 4
          %s492 = int_to_ptr.vmem [resolvable:$true] %s491
          %494 = dma.hbm_to_vmem [thread:$0]  %s489, 16, %s492, %s479
        $region48: #{tpu_custom_call.1} parent=15 // pred_fallthru
          _
      $region16: #{tpu_custom_call.1} parent=5 // pred_fallthru
        _
      %p495 = scmp.le.s32.totalorder 1, %s37
      %p496 = scmp.lt.s32.totalorder %s37, 3
      %p497 = pnand %p495, %p496
      %p498 = pneg %p497
      // Predicated region
      $region49: #{tpu_custom_call.1} parent=5 // pred_check
        _
      $region50: #{tpu_custom_call.1} parent=5 // pred_check_branch
        %500 = sbr.rel (%p497) target = $region52
      $region51: #{tpu_custom_call.1} parent=5 // pred_region
        %s501 = ssub.s32 %s37, 1
        %s502 = sand.u32 %s54, 1
        %s503 = scalar_lea.sflag [#allocation5], %s502
        %s504 = sand.u32 %s54, 1
        %s505 = scalar_lea.vmem [#allocation4], %s504
        // Predicated region
        $region53: #{tpu_custom_call.1} parent=51 // pred_check
          %p506 = pneg %p67
        $region54: #{tpu_custom_call.1} parent=51 // pred_check_branch
          %508 = sbr.rel (%p506) target = $region56
        $region55: #{tpu_custom_call.1} parent=51 // pred_region
          %509 = dma.done %s503, 16
        $region56: #{tpu_custom_call.1} parent=51 // pred_fallthru
          _
        %s510 = sand.u32 %s42, 1
        %s511 = scalar_lea.sflag [#allocation8], %s510
        %s512 = sand.u32 %s86, 1
        %s513 = scalar_lea.vmem [#allocation7], %s512
        // Predicated region
        $region57: #{tpu_custom_call.1} parent=51 // pred_check
          %p514 = pneg %p99
        $region58: #{tpu_custom_call.1} parent=51 // pred_check_branch
          %516 = sbr.rel (%p514) target = $region60
        $region59: #{tpu_custom_call.1} parent=51 // pred_region
          %517 = dma.done %s511, 16
        $region60: #{tpu_custom_call.1} parent=51 // pred_fallthru
          _
        %s518 = sand.u32 %s42, 1
        %s519 = scalar_lea.sflag [#allocation8], %s518
        %s520 = sand.u32 %s118, 1
        %s521 = scalar_lea.vmem [#allocation9], %s520
        // Predicated region
        $region61: #{tpu_custom_call.1} parent=51 // pred_check
          %p522 = pneg %p131
        $region62: #{tpu_custom_call.1} parent=51 // pred_check_branch
          %524 = sbr.rel (%p522) target = $region64
        $region63: #{tpu_custom_call.1} parent=51 // pred_region
          %525 = dma.done %s519, 16
        $region64: #{tpu_custom_call.1} parent=51 // pred_fallthru
          _
        %s526 = sand.u32 %s42, 1
        %s527 = scalar_lea.sflag [#allocation11], %s526
        %s528 = sand.u32 %s150, 1
        %s529 = scalar_lea.vmem [#allocation10], %s528
        // Predicated region
        $region65: #{tpu_custom_call.1} parent=51 // pred_check
          %p530 = pneg %p163
        $region66: #{tpu_custom_call.1} parent=51 // pred_check_branch
          %532 = sbr.rel (%p530) target = $region68
        $region67: #{tpu_custom_call.1} parent=51 // pred_region
          %533 = dma.done %s527, 16
        $region68: #{tpu_custom_call.1} parent=51 // pred_fallthru
          _
        %s534 = sand.u32 %s42, 1
        %s535 = scalar_lea.sflag [#allocation11], %s534
        %s536 = sand.u32 %s182, 1
        %s537 = scalar_lea.vmem [#allocation12], %s536
        // Predicated region
        $region69: #{tpu_custom_call.1} parent=51 // pred_check
          %p538 = pneg %p195
        $region70: #{tpu_custom_call.1} parent=51 // pred_check_branch
          %540 = sbr.rel (%p538) target = $region72
        $region71: #{tpu_custom_call.1} parent=51 // pred_region
          %541 = dma.done %s535, 16
        $region72: #{tpu_custom_call.1} parent=51 // pred_fallthru
          _
        %s542 = sand.u32 %s42, 1
        %s543 = scalar_lea.sflag [#allocation14], %s542
        %s544 = sand.u32 %s214, 1
        %s545 = scalar_lea.vmem [#allocation13], %s544
        // Predicated region
        $region73: #{tpu_custom_call.1} parent=51 // pred_check
          %p546 = pneg %p227
        $region74: #{tpu_custom_call.1} parent=51 // pred_check_branch
          %548 = sbr.rel (%p546) target = $region76
        $region75: #{tpu_custom_call.1} parent=51 // pred_region
          %549 = dma.done %s543, 16
        $region76: #{tpu_custom_call.1} parent=51 // pred_fallthru
          _
        %s550 = sand.u32 %s42, 1
        %s551 = scalar_lea.sflag [#allocation14], %s550
        %s552 = sand.u32 %s246, 1
        %s553 = scalar_lea.vmem [#allocation15], %s552
        // Predicated region
        $region77: #{tpu_custom_call.1} parent=51 // pred_check
          %p554 = pneg %p259
        $region78: #{tpu_custom_call.1} parent=51 // pred_check_branch
          %556 = sbr.rel (%p554) target = $region80
        $region79: #{tpu_custom_call.1} parent=51 // pred_region
          %557 = dma.done %s551, 16
        $region80: #{tpu_custom_call.1} parent=51 // pred_fallthru
          _
        %s558 = sand.u32 %s278, 1
        %s559 = scalar_lea.sflag [#allocation17], %s558
        %s560 = sand.u32 %s278, 1
        %s561 = scalar_lea.vmem [#allocation16], %s560
        // Predicated region
        $region81: #{tpu_custom_call.1} parent=51 // pred_check
          %p562 = pneg %p291
        $region82: #{tpu_custom_call.1} parent=51 // pred_check_branch
          %564 = sbr.rel (%p562) target = $region84
        $region83: #{tpu_custom_call.1} parent=51 // pred_region
          %565 = dma.done %s559, 16
        $region84: #{tpu_custom_call.1} parent=51 // pred_fallthru
          _
        %s566 = sand.u32 %s54, 1
        %s567 = scalar_lea.sflag [#allocation5], %s566
        %s568 = sand.u32 %s54, 1
        %s569 = scalar_lea.vmem [#allocation4], %s568
        %p570 = pneg %p67
        %p571 = pneg %p64
        %s572 = sand.u32 %s42, 1
        %s573 = scalar_lea.sflag [#allocation8], %s572
        %s574 = sand.u32 %s86, 1
        %s575 = scalar_lea.vmem [#allocation7], %s574
        %p576 = pneg %p99
        %p577 = pneg %p96
        %s578 = sand.u32 %s42, 1
        %s579 = scalar_lea.sflag [#allocation8], %s578
        %s580 = sand.u32 %s118, 1
        %s581 = scalar_lea.vmem [#allocation9], %s580
        %p582 = pneg %p131
        %p583 = pneg %p128
        %s584 = sand.u32 %s42, 1
        %s585 = scalar_lea.sflag [#allocation11], %s584
        %s586 = sand.u32 %s150, 1
        %s587 = scalar_lea.vmem [#allocation10], %s586
        %p588 = pneg %p163
        %p589 = pneg %p160
        %s590 = sand.u32 %s42, 1
        %s591 = scalar_lea.sflag [#allocation11], %s590
        %s592 = sand.u32 %s182, 1
        %s593 = scalar_lea.vmem [#allocation12], %s592
        %p594 = pneg %p195
        %p595 = pneg %p192
        %s596 = sand.u32 %s42, 1
        %s597 = scalar_lea.sflag [#allocation14], %s596
        %s598 = sand.u32 %s214, 1
        %s599 = scalar_lea.vmem [#allocation13], %s598
        %p600 = pneg %p227
        %p601 = pneg %p224
        %s602 = sand.u32 %s42, 1
        %s603 = scalar_lea.sflag [#allocation14], %s602
        %s604 = sand.u32 %s246, 1
        %s605 = scalar_lea.vmem [#allocation15], %s604
        %p606 = pneg %p259
        %p607 = pneg %p256
        %s608 = sand.u32 %s278, 1
        %s609 = scalar_lea.sflag [#allocation17], %s608
        %s610 = sand.u32 %s278, 1
        %s611 = scalar_lea.vmem [#allocation16], %s610
        %p612 = pneg %p291
        %p613 = pneg %p288
        %p614 = pneg %p317
        %p615 = pneg %p314
        %s616 = sand.u32 %s304, 1
        %s617 = scalar_lea.sflag [#allocation6], %s616
        %s618 = sand.u32 %s304, 1
        %s619 = smul.addr %s618, 8
        %s620 = scalar_lea.vmem [#allocation18], %s619
        %s621 = smul.u32 %s42, 8
        %s622 = sld [smem:[#allocation3 + %s621]]
        %s623 = smul.u32 %s42, 8
        %s624 = sadd.s32 %s623, 1
        %s625 = sld [smem:[#allocation3 + %s624]]
        %s626 = smul.u32 %s42, 8
        %s627 = sadd.s32 %s626, 2
        %s628 = sld [smem:[#allocation3 + %s627]]
        %s629 = smul.u32 %s42, 8
        %s630 = sadd.s32 %s629, 3
        %s631 = sld [smem:[#allocation3 + %s630]]
        %s632 = smul.u32 %s42, 8
        %s633 = sadd.s32 %s632, 4
        %s634 = sld [smem:[#allocation3 + %s633]]
        %s635 = smul.u32 %s42, 8
        %s636 = sadd.s32 %s635, 5
        %s637 = sld [smem:[#allocation3 + %s636]]
        %s638 = smul.u32 %s42, 8
        %s639 = sadd.s32 %s638, 6
        %s640 = sld [smem:[#allocation3 + %s639]]
        %s641 = smul.u32 %s42, 8
        %s642 = sadd.s32 %s641, 7
        %s643 = sld [smem:[#allocation3 + %s642]]
        %s644 = smul.u32 8, %s42
        %v645 = vld [vmem:[%s505] sm:$0x1]
        %646 = vst [vmem:[%s620] sm:$0x1] %v645
        %v647 = vld [vmem:[%s513] sm:$0x1]
        %s648 = scalar_lea.vmem %s620, 1 [#allocation18]
        %649 = vst [vmem:[%s648] sm:$0x1] %v647
        %v650 = vld [vmem:[%s521] sm:$0x1]
        %s651 = scalar_lea.vmem %s620, 2 [#allocation18]
        %652 = vst [vmem:[%s651] sm:$0x1] %v650
        %v653 = vld [vmem:[%s529] sm:$0x1]
        %s654 = scalar_lea.vmem %s620, 3 [#allocation18]
        %655 = vst [vmem:[%s654] sm:$0x1] %v653
        %v656 = vld [vmem:[%s537] sm:$0x1]
        %s657 = scalar_lea.vmem %s620, 4 [#allocation18]
        %658 = vst [vmem:[%s657] sm:$0x1] %v656
        %v659 = vld [vmem:[%s545] sm:$0x1]
        %s660 = scalar_lea.vmem %s620, 5 [#allocation18]
        %661 = vst [vmem:[%s660] sm:$0x1] %v659
        %v662 = vld [vmem:[%s553] sm:$0x1]
        %s663 = scalar_lea.vmem %s620, 6 [#allocation18]
        %664 = vst [vmem:[%s663] sm:$0x1] %v662
        %v665 = vld [vmem:[%s561] sm:$0x1]
        %s666 = scalar_lea.vmem %s620, 7 [#allocation18]
        %667 = vst [vmem:[%s666] sm:$0x1] %v665
        %s668 = sand.u32 %s304, 1
        %s669 = scalar_lea.sflag [#allocation6], %s668
        %s670 = sand.u32 %s304, 1
        %s671 = smul.addr %s670, 8
        %s672 = scalar_lea.vmem [#allocation18], %s671
        // Predicated region
        $region85: #{tpu_custom_call.1} parent=51 // pred_check
          %p673 = pneg %p314
        $region86: #{tpu_custom_call.1} parent=51 // pred_check_branch
          %675 = sbr.rel (%p673) target = $region88
        $region87: #{tpu_custom_call.1} parent=51 // pred_region
          %s676 = smul.u32 8, %s42
          %s678 = ssub.s32 128, 128
          %679 = vsyncadd %s669, %s678
          %s680 = smul.addr %s676, 16
          %s681 = scalar_lea.hbm %s9, %s680
          %s682 = sshll.u32 %s672, 4
          %s683 = int_to_ptr.vmem [resolvable:$true] %s682
          %688 = dma.vmem_to_hbm [thread:$0]  %s683, 128, %s681, %s669, 16, 16, 1
        $region88: #{tpu_custom_call.1} parent=51 // pred_fallthru
          _
      $region52: #{tpu_custom_call.1} parent=5 // pred_fallthru
        _
      %p689 = scmp.le.s32.totalorder 2, %s37
      // Predicated region
      $region89: #{tpu_custom_call.1} parent=5 // pred_check
        %p690 = pneg %p689
      $region90: #{tpu_custom_call.1} parent=5 // pred_check_branch
        %692 = sbr.rel (%p690) target = $region92
      $region91: #{tpu_custom_call.1} parent=5 // pred_region
        %s693 = ssub.s32 %s37, 2
        // Predicated region
        $region93: #{tpu_custom_call.1} parent=91 // pred_check
          %p694 = pneg %p320
        $region94: #{tpu_custom_call.1} parent=91 // pred_check_branch
          %696 = sbr.rel (%p694) target = $region96
        $region95: #{tpu_custom_call.1} parent=91 // pred_region
          %s697 = sand.u32 %s305, 1
          %s698 = scalar_lea.sflag [#allocation6], %s697
          %s699 = sand.u32 %s305, 1
          %s700 = smul.addr %s699, 8
          %s701 = scalar_lea.vmem [#allocation18], %s700
          %702 = dma.done %s698, 128
        $region96: #{tpu_custom_call.1} parent=91 // pred_fallthru
          _
      $region92: #{tpu_custom_call.1} parent=5 // pred_fallthru
        _
    $region6: #{tpu_custom_call.1} parent=1 // loop_footer
      %s41 = sadd.s32 1, %s37
    $region7: #{tpu_custom_call.1} parent=1 // loop_footer_branch
      %36 = sbr.rel target = $region3
    $region8: #{tpu_custom_call.1} parent=1 // loop_exit
      _
    %703 = vsyncpa [#allocation5], 1
    %s704 = scalar_lea.sflag [#allocation5], 1
    %705 = vsyncpa %s704, 1
    %706 = vsyncpa [#allocation8], 1
    %s707 = scalar_lea.sflag [#allocation8], 1
    %708 = vsyncpa %s707, 1
    %709 = vsyncpa [#allocation11], 1
    %s710 = scalar_lea.sflag [#allocation11], 1
    %711 = vsyncpa %s710, 1
    %712 = vsyncpa [#allocation14], 1
    %s713 = scalar_lea.sflag [#allocation14], 1
    %714 = vsyncpa %s713, 1
    %715 = vsyncpa [#allocation17], 1
    %s716 = scalar_lea.sflag [#allocation17], 1
    %717 = vsyncpa %s716, 1
    %718 = vsyncpa [#allocation6], 1
    %s719 = scalar_lea.sflag [#allocation6], 1
    %720 = vsyncpa %s719, 1

</llo_original>
